<compile_context>
chip_gen: v6e
topology: v6e:2x2x1
jax: 0.10.0
libtpu: 0.0.40
codegen_flags: <defaults>
</compile_context>

<pallas_src>
import jax
import jax.numpy as jnp
from jax.experimental import pallas as pl
from jax.experimental.pallas import tpu as pltpu

BN_EPS = 1e-5
_VMEM_LIMIT = 32 * 1024 * 1024  # safe on v5e/v6e (128 MiB phys) and v7x (64 MiB phys)


def _round_up(x, m):
    return (x + m - 1) // m * m


def _pick_tiles(nc, s):
    """Pick (row_tile, nc_pad, s_tile, s_pad) honoring the (8, 128) constraint."""
    # Lane (spatial) tile: as large as possible (512+ hits ~85% of HBM roofline).
    s_tile = None
    for t in (2048, 1024, 512, 256, 128):
        if s % t == 0:
            s_tile = t
            break
    if s_tile is None:
        s_tile = min(2048, _round_up(s, 128))
    s_pad = _round_up(s, s_tile)

    # Row (N*C) tile: multiple of 8 sublanes.
    r_tile = None
    for t in (256, 128, 64, 32, 16, 8):
        if nc % t == 0:
            r_tile = t
            break
    if r_tile is None:
        r_tile = min(64, _round_up(nc, 8))
    nc_pad = _round_up(nc, r_tile)
    return r_tile, nc_pad, s_tile, s_pad


def _stats_kernel(x_ref, sum_ref, sq_ref):
    # Grid: (row_tiles, spatial_tiles); spatial axis is the reduction axis
    # (last, "arbitrary"). sum_ref / sq_ref blocks are resident across it.
    @pl.when(pl.program_id(1) == 0)
    def _():
        sum_ref[...] = jnp.zeros_like(sum_ref)
        sq_ref[...] = jnp.zeros_like(sq_ref)

    x = x_ref[...].astype(jnp.float32)  # per-tile cast only
    sum_ref[...] += jnp.sum(x, axis=1, keepdims=True)
    sq_ref[...] += jnp.sum(x * x, axis=1, keepdims=True)


def _norm_kernel(x_ref, scale_ref, shift_ref, o_ref):
    # Pure elementwise FMA with per-row (N*C) scale/shift; lane-dense output.
    x = x_ref[...].astype(jnp.float32)
    o_ref[...] = (x * scale_ref[...] + shift_ref[...]).astype(o_ref.dtype)


def adaptive_batch_norm(g_features, noise, embed, w_gamma, b_gamma, w_bias, b_bias):
    """g_features: (N, C, D, H, W); noise: (N, noise_dim); embed: (N, embed_features)."""
    N, C, D, H, W = g_features.shape
    S = D * H * W
    NC = N * C

    x = g_features.reshape(NC, S)  # lane/sublane-dense slab
    r_tile, nc_pad, s_tile, s_pad = _pick_tiles(NC, S)
    if (nc_pad, s_pad) != (NC, S):
        # Zero padding: contributes 0 to the streamed sums; padded output is sliced off.
        x = jnp.pad(x, ((0, nc_pad - NC), (0, s_pad - S)))

    grid = (nc_pad // r_tile, s_pad // s_tile)
    x_bytes = nc_pad * s_pad * x.dtype.itemsize
    out_bytes = nc_pad * s_pad * g_features.dtype.itemsize

    # ---------------- pass 1: per-row streaming sum / sum of squares ----------
    row_sum, row_sq = pl.pallas_call(
        _stats_kernel,
        out_shape=(jax.ShapeDtypeStruct((nc_pad, 1), jnp.float32),
                   jax.ShapeDtypeStruct((nc_pad, 1), jnp.float32)),
        grid_spec=pltpu.PrefetchScalarGridSpec(
            num_scalar_prefetch=0,
            grid=grid,
            in_specs=[pl.BlockSpec((r_tile, s_tile), lambda r, s: (r, s))],
            out_specs=[pl.BlockSpec((r_tile, 1), lambda r, s: (r, 0)),
                       pl.BlockSpec((r_tile, 1), lambda r, s: (r, 0))]),
        compiler_params=pltpu.CompilerParams(
            dimension_semantics=("parallel", "arbitrary"),
            vmem_limit_bytes=_VMEM_LIMIT),
        cost_estimate=pl.CostEstimate(
            flops=3 * nc_pad * s_pad,
            transcendentals=0,
            bytes_accessed=x_bytes + 2 * nc_pad * 4),
    )(x)

    # -------- per-channel stats + conditioning linears (tiny, stays in XLA) ---
    inv_count = 1.0 / float(N * S)  # true element count (padding contributes 0)
    ch_sum = row_sum[:NC].reshape(N, C).sum(axis=0)
    ch_sq = row_sq[:NC].reshape(N, C).sum(axis=0)
    mean = ch_sum * inv_count
    var = jnp.maximum(ch_sq * inv_count - mean * mean, 0.0)  # biased, f32, clamped
    inv_std = jax.lax.rsqrt(var + BN_EPS)

    feats = jnp.concatenate([noise, embed], axis=1).astype(jnp.float32)  # (N, F)
    gamma = feats @ w_gamma.astype(jnp.float32) + b_gamma.astype(jnp.float32)  # (N, C)
    bias = feats @ w_bias.astype(jnp.float32) + b_bias.astype(jnp.float32)     # (N, C)

    # Fold normalization and modulation into one per-row FMA.
    scale = (gamma * inv_std[None, :]).reshape(NC, 1)
    shift = (bias - mean[None, :] * gamma * inv_std[None, :]).reshape(NC, 1)
    if nc_pad != NC:
        scale = jnp.pad(scale, ((0, nc_pad - NC), (0, 0)))
        shift = jnp.pad(shift, ((0, nc_pad - NC), (0, 0)))

    # ---------------- pass 2: out = x * scale + shift (fully parallel) --------
    out = pl.pallas_call(
        _norm_kernel,
        out_shape=jax.ShapeDtypeStruct((nc_pad, s_pad), g_features.dtype),
        grid_spec=pltpu.PrefetchScalarGridSpec(
            num_scalar_prefetch=0,
            grid=grid,
            in_specs=[pl.BlockSpec((r_tile, s_tile), lambda r, s: (r, s)),
                      pl.BlockSpec((r_tile, 1), lambda r, s: (r, 0)),
                      pl.BlockSpec((r_tile, 1), lambda r, s: (r, 0))],
            out_specs=pl.BlockSpec((r_tile, s_tile), lambda r, s: (r, s))),
        compiler_params=pltpu.CompilerParams(
            dimension_semantics=("parallel", "parallel"),
            vmem_limit_bytes=_VMEM_LIMIT),
        cost_estimate=pl.CostEstimate(
            flops=2 * nc_pad * s_pad,
            transcendentals=0,
            bytes_accessed=x_bytes + out_bytes + 2 * nc_pad * 4),
    )(x, scale, shift)

    return out[:NC, :S].reshape(N, C, D, H, W)


def _reference(g_features, noise, embed, w_gamma, b_gamma, w_bias, b_bias):
    feats = jnp.concatenate([noise, embed], axis=1)
    gamma = feats @ w_gamma + b_gamma
    bias = feats @ w_bias + b_bias
    mean = jnp.mean(g_features, axis=(0, 2, 3, 4), keepdims=True)
    var = jnp.mean((g_features - mean) ** 2, axis=(0, 2, 3, 4), keepdims=True)
    x_hat = (g_features - mean) / jnp.sqrt(var + BN_EPS)
    return x_hat * gamma[:, :, None, None, None] + bias[:, :, None, None, None]


if __name__ == "__main__":
    key = jax.random.PRNGKey(0)
    k1, k2, k3, k4, k5, k6, k7 = jax.random.split(key, 7)

    # Small shapes consistent with the module's forward.
    N = 2              # batch
    C = 4              # num_features
    D, H, W = 4, 8, 8  # 3-D spatial dims (NCDHW input to BatchNorm3d)
    noise_dim = 3
    embed_features = 5
    F = noise_dim + embed_features

    g_features = jax.random.normal(k1, (N, C, D, H, W), dtype=jnp.float32)
    noise = jax.random.normal(k2, (N, noise_dim), dtype=jnp.float32)
    embed = jax.random.normal(k3, (N, embed_features), dtype=jnp.float32)

    # Deterministic parameter init for the two nn.Linear(F, C) layers
    # (uniform in +/- 1/sqrt(F), like PyTorch's default).
    bound = 1.0 / (F ** 0.5)
    w_gamma = jax.random.uniform(k4, (F, C), minval=-bound, maxval=bound, dtype=jnp.float32)
    b_gamma = jax.random.uniform(k5, (C,), minval=-bound, maxval=bound, dtype=jnp.float32)
    w_bias = jax.random.uniform(k6, (F, C), minval=-bound, maxval=bound, dtype=jnp.float32)
    b_bias = jax.random.uniform(k7, (C,), minval=-bound, maxval=bound, dtype=jnp.float32)

    fn = jax.jit(adaptive_batch_norm)
    out = fn(g_features, noise, embed, w_gamma, b_gamma, w_bias, b_bias)
    out = jax.block_until_ready(out)

    ref = _reference(g_features, noise, embed, w_gamma, b_gamma, w_bias, b_bias)
    assert out.shape == (N, C, D, H, W)
    assert jnp.allclose(out, ref, atol=1e-4, rtol=1e-4)

    print("KERNEL_OK")
</pallas_src>

<mosaic_0001>
module attributes {stable_mosaic.version = 11 : i64} {
  func.func @_stats_kernel(%arg0: i32, %arg1: i32, %arg2: memref<8x256xf32, #tpu.memory_space<vmem>>, %arg3: memref<8x1xf32, #tpu.memory_space<vmem>>, %arg4: memref<8x1xf32, #tpu.memory_space<vmem>>) attributes {dimension_semantics = [#tpu.dimension_semantics<parallel>, #tpu.dimension_semantics<arbitrary>], iteration_bounds = array<i64: 1, 1>, scalar_prefetch = 0 : i64, scratch_operands = 0 : i64, tpu.core_type = #tpu.core_type<tc>, window_params = [{transform_indices = @transform_0, window_bounds = array<i64: 8, 256>}, {transform_indices = @transform_1, window_bounds = array<i64: 8, 1>}, {transform_indices = @transform_2, window_bounds = array<i64: 8, 1>}]} {
    %c0_i32 = arith.constant 0 : i32
    %0 = arith.cmpi eq, %arg1, %c0_i32 : i32
    %1 = arith.extui %0 : i1 to i32
    %c0_i32_0 = arith.constant 0 : i32
    %2 = arith.cmpi ne, %1, %c0_i32_0 : i32
    scf.if %2 {
      %cst_11 = arith.constant 0.000000e+00 : f32
      %15 = vector.broadcast %cst_11 : f32 to vector<8x1xf32>
      %c0_12 = arith.constant 0 : index
      %c0_13 = arith.constant 0 : index
      %16 = vector.load %arg3[%c0_12, %c0_13] : memref<8x1xf32, #tpu.memory_space<vmem>>, vector<8x1xf32>
      tpu.vector_store %arg3[%c0_12, %c0_13], %15 {strides = array<i32>} : memref<8x1xf32, #tpu.memory_space<vmem>>, vector<8x1xf32>,
      %cst_14 = arith.constant 0.000000e+00 : f32
      %17 = vector.broadcast %cst_14 : f32 to vector<8x1xf32>
      %c0_15 = arith.constant 0 : index
      %c0_16 = arith.constant 0 : index
      %18 = vector.load %arg4[%c0_15, %c0_16] : memref<8x1xf32, #tpu.memory_space<vmem>>, vector<8x1xf32>
      tpu.vector_store %arg4[%c0_15, %c0_16], %17 {strides = array<i32>} : memref<8x1xf32, #tpu.memory_space<vmem>>, vector<8x1xf32>,
    } else {
    }
    %c0 = arith.constant 0 : index
    %c0_1 = arith.constant 0 : index
    %3 = vector.load %arg2[%c0, %c0_1] : memref<8x256xf32, #tpu.memory_space<vmem>>, vector<8x256xf32>
    %c0_2 = arith.constant 0 : index
    %c0_3 = arith.constant 0 : index
    %4 = vector.load %arg3[%c0_2, %c0_3] : memref<8x1xf32, #tpu.memory_space<vmem>>, vector<8x1xf32>
    %cst = arith.constant dense<0.000000e+00> : vector<8xf32>
    %5 = vector.multi_reduction <add>, %3, %cst [1] : vector<8x256xf32> to vector<8xf32>
    %6 = vector.shape_cast %5 : vector<8xf32> to vector<8x1xf32>
    %7 = arith.addf %4, %6 : vector<8x1xf32>
    %c0_4 = arith.constant 0 : index
    %c0_5 = arith.constant 0 : index
    %8 = vector.load %arg3[%c0_4, %c0_5] : memref<8x1xf32, #tpu.memory_space<vmem>>, vector<8x1xf32>
    tpu.vector_store %arg3[%c0_4, %c0_5], %7 {strides = array<i32>} : memref<8x1xf32, #tpu.memory_space<vmem>>, vector<8x1xf32>,
    %c0_6 = arith.constant 0 : index
    %c0_7 = arith.constant 0 : index
    %9 = vector.load %arg4[%c0_6, %c0_7] : memref<8x1xf32, #tpu.memory_space<vmem>>, vector<8x1xf32>
    %10 = arith.mulf %3, %3 : vector<8x256xf32>
    %cst_8 = arith.constant dense<0.000000e+00> : vector<8xf32>
    %11 = vector.multi_reduction <add>, %10, %cst_8 [1] : vector<8x256xf32> to vector<8xf32>
    %12 = vector.shape_cast %11 : vector<8xf32> to vector<8x1xf32>
    %13 = arith.addf %9, %12 : vector<8x1xf32>
    %c0_9 = arith.constant 0 : index
    %c0_10 = arith.constant 0 : index
    %14 = vector.load %arg4[%c0_9, %c0_10] : memref<8x1xf32, #tpu.memory_space<vmem>>, vector<8x1xf32>
    tpu.vector_store %arg4[%c0_9, %c0_10], %13 {strides = array<i32>} : memref<8x1xf32, #tpu.memory_space<vmem>>, vector<8x1xf32>,
    return
  }
  func.func @transform_0(%arg0: i32, %arg1: i32) -> (i32, i32) {
    %c0_i32 = arith.constant 0 : i32
    return %arg0, %arg1 : i32, i32
  }
  func.func @transform_1(%arg0: i32, %arg1: i32) -> (i32, i32) {
    %c0_i32 = arith.constant 0 : i32
    %c0_i32_0 = arith.constant 0 : i32
    return %arg0, %c0_i32 : i32, i32
  }
  func.func @transform_2(%arg0: i32, %arg1: i32) -> (i32, i32) {
    %c0_i32 = arith.constant 0 : i32
    %c0_i32_0 = arith.constant 0 : i32
    return %arg0, %c0_i32 : i32, i32
  }
}

module attributes {stable_mosaic.version = 11 : i64} {
  func.func @_norm_kernel(%arg0: i32, %arg1: i32, %arg2: memref<8x256xf32, #tpu.memory_space<vmem>>, %arg3: memref<8x1xf32, #tpu.memory_space<vmem>>, %arg4: memref<8x1xf32, #tpu.memory_space<vmem>>, %arg5: memref<8x256xf32, #tpu.memory_space<vmem>>) attributes {dimension_semantics = [#tpu.dimension_semantics<parallel>, #tpu.dimension_semantics<parallel>], iteration_bounds = array<i64: 1, 1>, scalar_prefetch = 0 : i64, scratch_operands = 0 : i64, tpu.core_type = #tpu.core_type<tc>, window_params = [{transform_indices = @transform_0, window_bounds = array<i64: 8, 256>}, {transform_indices = @transform_1, window_bounds = array<i64: 8, 1>}, {transform_indices = @transform_2, window_bounds = array<i64: 8, 1>}, {transform_indices = @transform_3, window_bounds = array<i64: 8, 256>}]} {
    %c0 = arith.constant 0 : index
    %c0_0 = arith.constant 0 : index
    %0 = vector.load %arg2[%c0, %c0_0] : memref<8x256xf32, #tpu.memory_space<vmem>>, vector<8x256xf32>
    %c0_1 = arith.constant 0 : index
    %c0_2 = arith.constant 0 : index
    %1 = vector.load %arg3[%c0_1, %c0_2] : memref<8x1xf32, #tpu.memory_space<vmem>>, vector<8x1xf32>
    %2 = vector.broadcast %1 : vector<8x1xf32> to vector<8x256xf32>
    %3 = arith.mulf %0, %2 : vector<8x256xf32>
    %c0_3 = arith.constant 0 : index
    %c0_4 = arith.constant 0 : index
    %4 = vector.load %arg4[%c0_3, %c0_4] : memref<8x1xf32, #tpu.memory_space<vmem>>, vector<8x1xf32>
    %5 = vector.broadcast %4 : vector<8x1xf32> to vector<8x256xf32>
    %6 = arith.addf %3, %5 : vector<8x256xf32>
    %c0_5 = arith.constant 0 : index
    %c0_6 = arith.constant 0 : index
    %7 = vector.load %arg5[%c0_5, %c0_6] : memref<8x256xf32, #tpu.memory_space<vmem>>, vector<8x256xf32>
    tpu.vector_store %arg5[%c0_5, %c0_6], %6 {strides = array<i32>} : memref<8x256xf32, #tpu.memory_space<vmem>>, vector<8x256xf32>,
    return
  }
  func.func @transform_0(%arg0: i32, %arg1: i32) -> (i32, i32) {
    %c0_i32 = arith.constant 0 : i32
    return %arg0, %arg1 : i32, i32
  }
  func.func @transform_1(%arg0: i32, %arg1: i32) -> (i32, i32) {
    %c0_i32 = arith.constant 0 : i32
    %c0_i32_0 = arith.constant 0 : i32
    return %arg0, %c0_i32 : i32, i32
  }
  func.func @transform_2(%arg0: i32, %arg1: i32) -> (i32, i32) {
    %c0_i32 = arith.constant 0 : i32
    %c0_i32_0 = arith.constant 0 : i32
    return %arg0, %c0_i32 : i32, i32
  }
  func.func @transform_3(%arg0: i32, %arg1: i32) -> (i32, i32) {
    %c0_i32 = arith.constant 0 : i32
    return %arg0, %arg1 : i32, i32
  }
}

</mosaic_0001>

<llo_original>
// kernel: adaptive_batch_norm.2
$region0: #{adaptive_batch_norm.2}
  #allocation0 [shape = 'u32[]', space=smem, size = 0x4, offset = 0x4, fixed_abs, tag = 'smem constant byte address 0x4 - core index']
  #allocation1 [shape = 'u32[144,128]{1,0:T(1,128)}', space=vmem, size = 0x12000, scoped, tag = 'internal scratch']
  %s0 = inlined_call_operand.vmem [shape: f32[8,256], index: 0, kind: input, shape index: {}]
  %s1 = inlined_call_operand.vmem [shape: f32[8,1], index: 1, kind: output, shape index: {0}]
  %s2 = inlined_call_operand.vmem [shape: f32[8,1], index: 2, kind: output, shape index: {1}]
  %3 = xla_tuple %s1, %s2
  %s4 = sld [smem:[#allocation0]]
  $region26: #{adaptive_batch_norm.2} parent=0
    _
  %s6 = ssub.s32 1, %s4
  %s7 = scalar_select 0, %s6, %s4
  // Predicated region
  $region2: #{adaptive_batch_norm.2} parent=0 // pred_check
    _
  $region3: #{adaptive_batch_norm.2} parent=0 // pred_check_branch
    %9 = sbr.rel (0) target = $region5
  $region4: #{adaptive_batch_norm.2} parent=0 // pred_region
    _
  $region5: #{adaptive_batch_norm.2} parent=0 // pred_fallthru
    _
  %p10 = scmp.eq.s32.totalorder 0, 0
  // Predicated region
  $region6: #{adaptive_batch_norm.2} parent=0 // pred_check
    %p11 = pneg %p10
  $region7: #{adaptive_batch_norm.2} parent=0 // pred_check_branch
    %13 = sbr.rel (%p11) target = $region9
  $region8: #{adaptive_batch_norm.2} parent=0 // pred_region
    %vm14 = vcmask 7168
    %15 = vst.msk [vmem:[%s1] sm:$0xff] %vm14, 0.0
    %16 = vst.msk [vmem:[%s2] sm:$0xff] %vm14, 0.0
  $region9: #{adaptive_batch_norm.2} parent=0 // pred_fallthru
    _
  %v17 = vld [vmem:[%s0] sm:$0xff]
  %v18 = vld [vmem:[%s0 + $0x8] sm:$0xff]
  %v19 = vld [vmem:[%s1] sm:$0xff]
  %v20 = vadd.f32 %v17, %v18
  %21 = vadd.xlane.f32.xlu0 %v20
  %v22 = vpop.xlane.xlu0 %21
  %v23 = vadd.f32 %v19, %v22
  %vm24 = vcmask 7168
  %25 = vst.msk [vmem:[%s1] sm:$0xff] %vm24, %v23
  %v26 = vld [vmem:[%s2] sm:$0xff]
  %v27 = vmul.f32 %v17, %v17
  %v28 = vmul.f32 %v18, %v18
  %v29 = vadd.f32 %v27, %v28
  %30 = vadd.xlane.f32.xlu0 %v29
  %v31 = vpop.xlane.xlu0 %30
  %v32 = vadd.f32 %v26, %v31
  %33 = vst.msk [vmem:[%s2] sm:$0xff] %vm24, %v32
  // Predicated region
  $region10: #{adaptive_batch_norm.2} parent=0 // pred_check
    _
  $region11: #{adaptive_batch_norm.2} parent=0 // pred_check_branch
    %35 = sbr.rel (0) target = $region13
  $region12: #{adaptive_batch_norm.2} parent=0 // pred_region
    _
  $region13: #{adaptive_batch_norm.2} parent=0 // pred_fallthru
    _
  // Predicated region
  $region14: #{adaptive_batch_norm.2} parent=0 // pred_check
    _
  $region15: #{adaptive_batch_norm.2} parent=0 // pred_check_branch
    %37 = sbr.rel (0) target = $region17
  $region16: #{adaptive_batch_norm.2} parent=0 // pred_region
    _
  $region17: #{adaptive_batch_norm.2} parent=0 // pred_fallthru
    _
  // Predicated region
  $region18: #{adaptive_batch_norm.2} parent=0 // pred_check
    _
  $region19: #{adaptive_batch_norm.2} parent=0 // pred_check_branch
    %39 = sbr.rel (0) target = $region21
  $region20: #{adaptive_batch_norm.2} parent=0 // pred_region
    _
  $region21: #{adaptive_batch_norm.2} parent=0 // pred_fallthru
    _
  // Predicated region
  $region22: #{adaptive_batch_norm.2} parent=0 // pred_check
    _
  $region23: #{adaptive_batch_norm.2} parent=0 // pred_check_branch
    %41 = sbr.rel (0) target = $region25
  $region24: #{adaptive_batch_norm.2} parent=0 // pred_region
    _
  $region25: #{adaptive_batch_norm.2} parent=0 // pred_fallthru
    _

// kernel: adaptive_batch_norm.3
$region0: #{adaptive_batch_norm.3}
  #allocation0 [shape = 'u32[]', space=smem, size = 0x4, offset = 0x4, fixed_abs, tag = 'smem constant byte address 0x4 - core index']
  #allocation1 [shape = 'u32[144,128]{1,0:T(1,128)}', space=vmem, size = 0x12000, scoped, tag = 'internal scratch']
  %s0 = inlined_call_operand.vmem [shape: f32[8,256], index: 0, kind: input, shape index: {}]
  %s1 = inlined_call_operand.vmem [shape: f32[8,1], index: 1, kind: input, shape index: {}]
  %s2 = inlined_call_operand.vmem [shape: f32[8,1], index: 2, kind: input, shape index: {}]
  %s3 = inlined_call_operand.vmem [shape: f32[8,256], index: 3, kind: output, shape index: {}]
  %s4 = sld [smem:[#allocation0]]
  $region22: #{adaptive_batch_norm.3} parent=0
    _
  %s6 = ssub.s32 1, %s4
  %s7 = scalar_select 0, %s6, %s4
  // Predicated region
  $region2: #{adaptive_batch_norm.3} parent=0 // pred_check
    _
  $region3: #{adaptive_batch_norm.3} parent=0 // pred_check_branch
    %9 = sbr.rel (0) target = $region5
  $region4: #{adaptive_batch_norm.3} parent=0 // pred_region
    _
  $region5: #{adaptive_batch_norm.3} parent=0 // pred_fallthru
    _
  // Predicated region
  $region6: #{adaptive_batch_norm.3} parent=0 // pred_check
    _
  $region7: #{adaptive_batch_norm.3} parent=0 // pred_check_branch
    %11 = sbr.rel (0) target = $region9
  $region8: #{adaptive_batch_norm.3} parent=0 // pred_region
    _
  $region9: #{adaptive_batch_norm.3} parent=0 // pred_fallthru
    _
  // Predicated region
  $region10: #{adaptive_batch_norm.3} parent=0 // pred_check
    _
  $region11: #{adaptive_batch_norm.3} parent=0 // pred_check_branch
    %13 = sbr.rel (0) target = $region13
  $region12: #{adaptive_batch_norm.3} parent=0 // pred_region
    _
  $region13: #{adaptive_batch_norm.3} parent=0 // pred_fallthru
    _
  %v14 = vld [vmem:[%s0] sm:$0xff]
  %v15 = vld [vmem:[%s0 + $0x8] sm:$0xff]
  %v16 = vld [vmem:[%s1] sm:$0xff]
  %18 = vset.pattern.permute.xlu0 0
  %19 = vperm.xlu0 %18, %v16
  %v20 = vpop.permute.xlu0 %19
  %v22 = vmul.f32 %v14, %v20
  %v23 = vmul.f32 %v15, %v20
  %v24 = vld [vmem:[%s2] sm:$0xff]
  %26 = vset.pattern.permute.xlu0 0
  %27 = vperm.xlu0 %26, %v24
  %v28 = vpop.permute.xlu0 %27
  %v30 = vadd.f32 %v22, %v28
  %v31 = vadd.f32 %v23, %v28
  %32 = vst [vmem:[%s3] sm:$0xff] %v30
  %33 = vst [vmem:[%s3 + $0x8] sm:$0xff] %v31
  // Predicated region
  $region14: #{adaptive_batch_norm.3} parent=0 // pred_check
    _
  $region15: #{adaptive_batch_norm.3} parent=0 // pred_check_branch
    %35 = sbr.rel (0) target = $region17
  $region16: #{adaptive_batch_norm.3} parent=0 // pred_region
    _
  $region17: #{adaptive_batch_norm.3} parent=0 // pred_fallthru
    _
  // Predicated region
  $region18: #{adaptive_batch_norm.3} parent=0 // pred_check
    _
  $region19: #{adaptive_batch_norm.3} parent=0 // pred_check_branch
    %37 = sbr.rel (0) target = $region21
  $region20: #{adaptive_batch_norm.3} parent=0 // pred_region
    _
  $region21: #{adaptive_batch_norm.3} parent=0 // pred_fallthru
    _

</llo_original>
